<compile_context>
chip_gen: v5e
topology: v5e:2x2
jax: 0.10.0
libtpu: 0.0.40
codegen_flags: <defaults>
</compile_context>

<pallas_src>
import functools

import jax
import jax.numpy as jnp
from jax.experimental import pallas as pl
from jax.experimental.pallas import tpu as pltpu


def _round_up(n: int, m: int) -> int:
    return ((n + m - 1) // m) * m


def _cdiv(a: int, b: int) -> int:
    return (a + b - 1) // b


# --------------------------------------------------------------------------- #
# Kernel: one batch tile of x; weights/biases are VMEM-resident across the grid.
# --------------------------------------------------------------------------- #
def dqn_mlp_kernel(x_ref, w1_ref, b1_ref, w2_ref, b2_ref, w3_ref, b3_ref, out_ref):
    x = x_ref[...]
    cdt = x_ref.dtype  # MXU input dtype (bf16)

    # Layer 1: Linear + ReLU (MXU matmul, f32 accumulation; bias/ReLU in f32)
    h1 = jnp.dot(x, w1_ref[...], preferred_element_type=jnp.float32) + b1_ref[...]
    h1 = jnp.maximum(h1, 0.0).astype(cdt)

    # Layer 2: Linear + ReLU
    h2 = jnp.dot(h1, w2_ref[...], preferred_element_type=jnp.float32) + b2_ref[...]
    h2 = jnp.maximum(h2, 0.0).astype(cdt)

    # Layer 3: Linear (Q-values, no activation)
    q = jnp.dot(h2, w3_ref[...], preferred_element_type=jnp.float32) + b3_ref[...]

    out_ref[...] = q.astype(out_ref.dtype)


# --------------------------------------------------------------------------- #
# One-time parameter preparation (pad feature dims to 128, cast to bf16).
# Do this once per parameter version, NOT per forward call.
# --------------------------------------------------------------------------- #
def prepare_dqn_params(params, compute_dtype=jnp.bfloat16):
    w1, b1, w2, b2, w3, b3 = params
    in_size, hidden = w1.shape
    out_size = w3.shape[1]
    hid_p = _round_up(hidden, 128)
    out_p = _round_up(out_size, 128)

    def pad2(a, rows, cols):
        return jnp.pad(a, ((0, rows - a.shape[0]), (0, cols - a.shape[1])))

    w1p = pad2(w1, in_size, hid_p).astype(compute_dtype)   # K = raw in_size (resident)
    b1p = pad2(b1.reshape(1, -1), 1, hid_p).astype(jnp.float32)
    w2p = pad2(w2, hid_p, hid_p).astype(compute_dtype)
    b2p = pad2(b2.reshape(1, -1), 1, hid_p).astype(jnp.float32)
    w3p = pad2(w3, hid_p, out_p).astype(compute_dtype)
    b3p = pad2(b3.reshape(1, -1), 1, out_p).astype(jnp.float32)
    return (w1p, b1p, w2p, b2p, w3p, b3p)


# --------------------------------------------------------------------------- #
# Forward: fused 3-layer MLP over a batch-tiled grid.
# --------------------------------------------------------------------------- #
def dqn_forward(x, prepared_params, *, out_size,
                compute_dtype=jnp.bfloat16, out_dtype=jnp.bfloat16, tb_max=2048):
    w1p, b1p, w2p, b2p, w3p, b3p = prepared_params
    batch = x.shape[0]
    in_size = w1p.shape[0]
    hid_p = w1p.shape[1]
    out_p = w3p.shape[1]

    cd_bytes = jnp.dtype(compute_dtype).itemsize
    out_bytes = jnp.dtype(out_dtype).itemsize

    # ---- Tile selection: VMEM-aware cap, tail-padding-aware, >=2 tiles for v7x ----
    per_row = (2 * in_size * cd_bytes      # double-buffered x tile (bf16)
               + 2 * out_p * out_bytes     # double-buffered out tile
               + 2 * hid_p * 4             # h1/h2 f32 accumulators
               + 2 * hid_p * cd_bytes)     # bf16 copies feeding the next matmul
    weight_bytes = (2 * cd_bytes * (in_size * hid_p + hid_p * hid_p + hid_p * out_p)
                    + 3 * 4 * max(hid_p, out_p))          # biases, negligible
    vmem_target = 48 * 1024 * 1024                        # < v7x's 64 MiB physical
    tb_cap = max(8, ((vmem_target - weight_bytes) // max(per_row, 1)) // 8 * 8)
    tb_cap = min(tb_cap, tb_max)

    batch8 = _round_up(batch, 8)
    # At least 2 tiles when batch is non-trivial so dimension_semantics=("parallel",)
    # actually shards across v7x's two TensorCores and x/out DMAs pipeline.
    min_tiles = 2 if batch8 >= 16 else 1
    num_tiles = max(min_tiles, _cdiv(batch8, tb_cap))
    tb = _round_up(_cdiv(batch, num_tiles), 8)            # <= 7 rows padding per tile
    batch_p = tb * num_tiles

    # Explicit VMEM limit (covers v5e's 16 MiB default scoped; safe on v7x's 64 MiB).
    vmem_limit = int(min(max((per_row * tb + weight_bytes) * 3 // 2,
                             16 * 1024 * 1024),
                         60 * 1024 * 1024))

    # Only the batch dim of x is padded (feature dim stays raw -> 8x less x DMA
    # for small input_size); cast to bf16 for MXU.
    xp = x
    if batch_p != batch:
        xp = jnp.pad(xp, ((0, batch_p - batch), (0, 0)))
    xp = xp.astype(compute_dtype)

    def resident(arr):
        # Same block for every grid step -> DMA'd once, stays VMEM-resident.
        return pl.BlockSpec(arr.shape, lambda i: (0, 0))

    out_padded = pl.pallas_call(
        dqn_mlp_kernel,
        out_shape=jax.ShapeDtypeStruct((batch_p, out_p), out_dtype),
        grid=(num_tiles,),
        in_specs=[
            pl.BlockSpec((tb, in_size), lambda i: (i, 0)),  # x: batch-tiled, raw K
            resident(w1p), resident(b1p),
            resident(w2p), resident(b2p),
            resident(w3p), resident(b3p),
        ],
        out_specs=pl.BlockSpec((tb, out_p), lambda i: (i, 0)),
        compiler_params=pltpu.CompilerParams(
            dimension_semantics=("parallel",),
            vmem_limit_bytes=vmem_limit,
        ),
    )(xp, w1p, b1p, w2p, b2p, w3p, b3p)

    # TODO(synk): consumers that tolerate padded Q-values can take out_padded
    # directly and skip this slice (minor per-call XLA copy).
    return out_padded[:batch, :out_size]


# --------------------------------------------------------------------------- #
# Init + pure-JAX references
# --------------------------------------------------------------------------- #
def init_dqn_params(key, input_size, hidden_size, output_size):
    """PyTorch nn.Linear-style init (uniform +/- 1/sqrt(fan_in))."""
    ks = jax.random.split(key, 6)

    def linear(kw, kb, fan_in, fan_out):
        bound = 1.0 / jnp.sqrt(fan_in)
        w = jax.random.uniform(kw, (fan_in, fan_out), jnp.float32, -bound, bound)
        b = jax.random.uniform(kb, (1, fan_out), jnp.float32, -bound, bound)
        return w, b

    w1, b1 = linear(ks[0], ks[1], input_size, hidden_size)
    w2, b2 = linear(ks[2], ks[3], hidden_size, hidden_size)
    w3, b3 = linear(ks[4], ks[5], hidden_size, output_size)
    return (w1, b1, w2, b2, w3, b3)


def dqn_forward_ref(x, params, compute_dtype=jnp.bfloat16):
    """Pure-JAX reference with the same bf16-in / f32-accumulate numerics."""
    w1, b1, w2, b2, w3, b3 = params
    cd = compute_dtype
    h1 = jnp.maximum(
        jnp.dot(x.astype(cd), w1.astype(cd), preferred_element_type=jnp.float32) + b1, 0.0)
    h2 = jnp.maximum(
        jnp.dot(h1.astype(cd), w2.astype(cd), preferred_element_type=jnp.float32) + b2, 0.0)
    return jnp.dot(h2.astype(cd), w3.astype(cd), preferred_element_type=jnp.float32) + b3


if __name__ == "__main__":
    # Small shapes consistent with the module: x is (batch, input_size).
    batch, input_size, hidden_size, output_size = 2, 16, 32, 8

    key = jax.random.PRNGKey(0)
    k_x, k_x2, k_p = jax.random.split(key, 3)

    x = jax.random.normal(k_x, (batch, input_size), jnp.float32)
    params = init_dqn_params(k_p, input_size, hidden_size, output_size)

    # Pad/cast params exactly once; forward takes the prepared arrays.
    prepared = prepare_dqn_params(params)
    forward = jax.jit(functools.partial(dqn_forward, out_size=output_size))

    out = jax.block_until_ready(forward(x, prepared)).astype(jnp.float32)

    ref_bf16 = jax.block_until_ready(dqn_forward_ref(x, params))
    ref_f32 = jax.block_until_ready(dqn_forward_ref(x, params, compute_dtype=jnp.float32))

    assert out.shape == (batch, output_size)
    assert jnp.allclose(out, ref_bf16, atol=2e-2, rtol=2e-2), "mismatch vs bf16 JAX reference"
    assert jnp.allclose(out, ref_f32, atol=1e-1, rtol=1e-1), "mismatch vs f32 JAX reference"

    # Secondary check: batch large enough to exercise the multi-tile (grid >= 2) path.
    x2 = jax.random.normal(k_x2, (64, input_size), jnp.float32)
    out2 = jax.block_until_ready(forward(x2, prepared)).astype(jnp.float32)
    ref2 = jax.block_until_ready(dqn_forward_ref(x2, params))
    assert out2.shape == (64, output_size)
    assert jnp.allclose(out2, ref2, atol=2e-2, rtol=2e-2), "multi-tile mismatch vs bf16 reference"

    print("KERNEL_OK")
</pallas_src>

<mosaic_0001>
module attributes {stable_mosaic.version = 11 : i64} {
  func.func @dqn_mlp_kernel(%arg0: i32, %arg1: memref<8x16xbf16, #tpu.memory_space<vmem>>, %arg2: memref<16x128xbf16, #tpu.memory_space<vmem>>, %arg3: memref<1x128xf32, #tpu.memory_space<vmem>>, %arg4: memref<128x128xbf16, #tpu.memory_space<vmem>>, %arg5: memref<1x128xf32, #tpu.memory_space<vmem>>, %arg6: memref<128x128xbf16, #tpu.memory_space<vmem>>, %arg7: memref<1x128xf32, #tpu.memory_space<vmem>>, %arg8: memref<8x128xbf16, #tpu.memory_space<vmem>>) attributes {dimension_semantics = [#tpu.dimension_semantics<parallel>], iteration_bounds = array<i64: 1>, scalar_prefetch = 0 : i64, scratch_operands = 0 : i64, tpu.core_type = #tpu.core_type<tc>, window_params = [{transform_indices = @transform_0, window_bounds = array<i64: 8, 16>}, {pipeline_mode = #tpu.pipeline_mode<synchronous>, transform_indices = @transform_1, window_bounds = array<i64: 16, 128>}, {pipeline_mode = #tpu.pipeline_mode<synchronous>, transform_indices = @transform_2, window_bounds = array<i64: 1, 128>}, {pipeline_mode = #tpu.pipeline_mode<synchronous>, transform_indices = @transform_3, window_bounds = array<i64: 128, 128>}, {pipeline_mode = #tpu.pipeline_mode<synchronous>, transform_indices = @transform_4, window_bounds = array<i64: 1, 128>}, {pipeline_mode = #tpu.pipeline_mode<synchronous>, transform_indices = @transform_5, window_bounds = array<i64: 128, 128>}, {pipeline_mode = #tpu.pipeline_mode<synchronous>, transform_indices = @transform_6, window_bounds = array<i64: 1, 128>}, {transform_indices = @transform_7, window_bounds = array<i64: 8, 128>}]} {
    %c0 = arith.constant 0 : index
    %c0_0 = arith.constant 0 : index
    %0 = vector.load %arg1[%c0, %c0_0] : memref<8x16xbf16, #tpu.memory_space<vmem>>, vector<8x16xbf16>
    %c0_1 = arith.constant 0 : index
    %c0_2 = arith.constant 0 : index
    %1 = vector.load %arg2[%c0_1, %c0_2] : memref<16x128xbf16, #tpu.memory_space<vmem>>, vector<16x128xbf16>
    %cst = arith.constant dense<0.000000e+00> : vector<8x128xf32>
    %2 = tpu.matmul %0, %1, %cst {dimension_numbers = #tpu.dot_dimension_numbers<[1], [0], [0], [1], [0, 0, 1, 1], [], []>} : vector<8x16xbf16>, vector<16x128xbf16>, vector<8x128xf32> -> vector<8x128xf32>
    %c0_3 = arith.constant 0 : index
    %c0_4 = arith.constant 0 : index
    %3 = vector.load %arg3[%c0_3, %c0_4] : memref<1x128xf32, #tpu.memory_space<vmem>>, vector<1x128xf32>
    %4 = vector.broadcast %3 : vector<1x128xf32> to vector<8x128xf32>
    %5 = arith.addf %2, %4 : vector<8x128xf32>
    %cst_5 = arith.constant 0.000000e+00 : f32
    %6 = vector.broadcast %cst_5 : f32 to vector<8x128xf32>
    %7 = arith.maximumf %5, %6 : vector<8x128xf32>
    %8 = arith.truncf %7 : vector<8x128xf32> to vector<8x128xbf16>
    %c0_6 = arith.constant 0 : index
    %c0_7 = arith.constant 0 : index
    %9 = vector.load %arg4[%c0_6, %c0_7] : memref<128x128xbf16, #tpu.memory_space<vmem>>, vector<128x128xbf16>
    %cst_8 = arith.constant dense<0.000000e+00> : vector<8x128xf32>
    %10 = tpu.matmul %8, %9, %cst_8 {dimension_numbers = #tpu.dot_dimension_numbers<[1], [0], [0], [1], [0, 0, 1, 1], [], []>} : vector<8x128xbf16>, vector<128x128xbf16>, vector<8x128xf32> -> vector<8x128xf32>
    %c0_9 = arith.constant 0 : index
    %c0_10 = arith.constant 0 : index
    %11 = vector.load %arg5[%c0_9, %c0_10] : memref<1x128xf32, #tpu.memory_space<vmem>>, vector<1x128xf32>
    %12 = vector.broadcast %11 : vector<1x128xf32> to vector<8x128xf32>
    %13 = arith.addf %10, %12 : vector<8x128xf32>
    %cst_11 = arith.constant 0.000000e+00 : f32
    %14 = vector.broadcast %cst_11 : f32 to vector<8x128xf32>
    %15 = arith.maximumf %13, %14 : vector<8x128xf32>
    %16 = arith.truncf %15 : vector<8x128xf32> to vector<8x128xbf16>
    %c0_12 = arith.constant 0 : index
    %c0_13 = arith.constant 0 : index
    %17 = vector.load %arg6[%c0_12, %c0_13] : memref<128x128xbf16, #tpu.memory_space<vmem>>, vector<128x128xbf16>
    %cst_14 = arith.constant dense<0.000000e+00> : vector<8x128xf32>
    %18 = tpu.matmul %16, %17, %cst_14 {dimension_numbers = #tpu.dot_dimension_numbers<[1], [0], [0], [1], [0, 0, 1, 1], [], []>} : vector<8x128xbf16>, vector<128x128xbf16>, vector<8x128xf32> -> vector<8x128xf32>
    %c0_15 = arith.constant 0 : index
    %c0_16 = arith.constant 0 : index
    %19 = vector.load %arg7[%c0_15, %c0_16] : memref<1x128xf32, #tpu.memory_space<vmem>>, vector<1x128xf32>
    %20 = vector.broadcast %19 : vector<1x128xf32> to vector<8x128xf32>
    %21 = arith.addf %18, %20 : vector<8x128xf32>
    %22 = arith.truncf %21 : vector<8x128xf32> to vector<8x128xbf16>
    %c0_17 = arith.constant 0 : index
    %c0_18 = arith.constant 0 : index
    %23 = vector.load %arg8[%c0_17, %c0_18] : memref<8x128xbf16, #tpu.memory_space<vmem>>, vector<8x128xbf16>
    tpu.vector_store %arg8[%c0_17, %c0_18], %22 {strides = array<i32>} : memref<8x128xbf16, #tpu.memory_space<vmem>>, vector<8x128xbf16>,
    return
  }
  func.func @transform_0(%arg0: i32) -> (i32, i32) {
    %c0_i32 = arith.constant 0 : i32
    %c0_i32_0 = arith.constant 0 : i32
    return %arg0, %c0_i32 : i32, i32
  }
  func.func @transform_1(%arg0: i32) -> (i32, i32) {
    %c0_i32 = arith.constant 0 : i32
    %c0_i32_0 = arith.constant 0 : i32
    %c0_i32_1 = arith.constant 0 : i32
    return %c0_i32, %c0_i32_0 : i32, i32
  }
  func.func @transform_2(%arg0: i32) -> (i32, i32) {
    %c0_i32 = arith.constant 0 : i32
    %c0_i32_0 = arith.constant 0 : i32
    %c0_i32_1 = arith.constant 0 : i32
    return %c0_i32, %c0_i32_0 : i32, i32
  }
  func.func @transform_3(%arg0: i32) -> (i32, i32) {
    %c0_i32 = arith.constant 0 : i32
    %c0_i32_0 = arith.constant 0 : i32
    %c0_i32_1 = arith.constant 0 : i32
    return %c0_i32, %c0_i32_0 : i32, i32
  }
  func.func @transform_4(%arg0: i32) -> (i32, i32) {
    %c0_i32 = arith.constant 0 : i32
    %c0_i32_0 = arith.constant 0 : i32
    %c0_i32_1 = arith.constant 0 : i32
    return %c0_i32, %c0_i32_0 : i32, i32
  }
  func.func @transform_5(%arg0: i32) -> (i32, i32) {
    %c0_i32 = arith.constant 0 : i32
    %c0_i32_0 = arith.constant 0 : i32
    %c0_i32_1 = arith.constant 0 : i32
    return %c0_i32, %c0_i32_0 : i32, i32
  }
  func.func @transform_6(%arg0: i32) -> (i32, i32) {
    %c0_i32 = arith.constant 0 : i32
    %c0_i32_0 = arith.constant 0 : i32
    %c0_i32_1 = arith.constant 0 : i32
    return %c0_i32, %c0_i32_0 : i32, i32
  }
  func.func @transform_7(%arg0: i32) -> (i32, i32) {
    %c0_i32 = arith.constant 0 : i32
    %c0_i32_0 = arith.constant 0 : i32
    return %arg0, %c0_i32 : i32, i32
  }
}

</mosaic_0001>

<llo_original>
// kernel: dqn_forward.1
$region0: #{dqn_forward.1}
  #allocation0 [shape = 'u32[]', space=smem, size = 0x4, offset = 0x4, fixed_abs, tag = 'smem constant byte address 0x4 - core index']
  #allocation1 [shape = 'u32[72,128]{1,0:T(1,128)}', space=vmem, size = 0x9000, scoped, tag = 'internal scratch']
  %s0 = inlined_call_operand.vmem [shape: bf16[8,16], index: 0, kind: input, shape index: {}]
  %s1 = inlined_call_operand.vmem [shape: bf16[16,128], index: 1, kind: input, shape index: {}]
  %s2 = inlined_call_operand.vmem [shape: f32[1,128], index: 2, kind: input, shape index: {}]
  %s3 = inlined_call_operand.hbm [shape: bf16[128,128], index: 3, kind: input, shape index: {}]
  %s4 = inlined_call_operand.vmem [shape: f32[1,128], index: 4, kind: input, shape index: {}]
  %s5 = inlined_call_operand.hbm [shape: bf16[128,128], index: 5, kind: input, shape index: {}]
  %s6 = inlined_call_operand.vmem [shape: f32[1,128], index: 6, kind: input, shape index: {}]
  %s7 = inlined_call_operand.vmem [shape: bf16[8,128], index: 7, kind: output, shape index: {}]
  %s8 = sld [smem:[#allocation0]]
  $region46: #{dqn_forward.1} parent=0
    _
  %s10 = ssub.s32 1, %s8
  %s11 = scalar_select 0, %s10, %s8
  $region1: #{dqn_forward.1} parent=0
    #allocation2 [shape = 'u8[32768]{0}', space=vmem, size = 0x8000, scoped, tag = 'input window, operand 3, single buffered']
    #allocation3 [shape = 's32[1]{0}', space=sflag, size = 0x4, scoped, tag = 'scoped memory for dqn_forward.1']
    #allocation4 [shape = 'u8[32768]{0}', space=vmem, size = 0x8000, scoped, tag = 'input window, operand 5, single buffered']
    #allocation5 [shape = 's32[1]{0}', space=sflag, size = 0x4, scoped, tag = 'scoped memory for dqn_forward.1']
    %12 = vsyncpa [#allocation3], 0
    %13 = vsyncpa [#allocation5], 0
    // Predicated region
    $region2: #{dqn_forward.1} parent=1 // pred_check
      _
    $region3: #{dqn_forward.1} parent=1 // pred_check_branch
      %15 = sbr.rel (0) target = $region5
    $region4: #{dqn_forward.1} parent=1 // pred_region
      _
    $region5: #{dqn_forward.1} parent=1 // pred_fallthru
      _
    // Predicated region
    $region6: #{dqn_forward.1} parent=1 // pred_check
      _
    $region7: #{dqn_forward.1} parent=1 // pred_check_branch
      %17 = sbr.rel (0) target = $region9
    $region8: #{dqn_forward.1} parent=1 // pred_region
      _
    $region9: #{dqn_forward.1} parent=1 // pred_fallthru
      _
    // Predicated region
    $region10: #{dqn_forward.1} parent=1 // pred_check
      _
    $region11: #{dqn_forward.1} parent=1 // pred_check_branch
      %19 = sbr.rel (0) target = $region13
    $region12: #{dqn_forward.1} parent=1 // pred_region
      _
    $region13: #{dqn_forward.1} parent=1 // pred_fallthru
      _
    // Predicated region
    $region14: #{dqn_forward.1} parent=1 // pred_check
      _
    $region15: #{dqn_forward.1} parent=1 // pred_check_branch
      %21 = sbr.rel (0) target = $region17
    $region16: #{dqn_forward.1} parent=1 // pred_region
      %23 = vsyncadd [#allocation3], 0
      %s24 = sshll.u32 %s3, 4
      %s25 = int_to_ptr.hbm [resolvable:$true] %s24
      %s26 = sshll.u32 [#allocation2], 4
      %s27 = int_to_ptr.vmem [resolvable:$true] %s26
      %32 = dma.hbm_to_vmem [thread:$0]  %s25, 1024, %s27, [#allocation3], 64, 64, 4
    $region17: #{dqn_forward.1} parent=1 // pred_fallthru
      _
    // Predicated region
    $region18: #{dqn_forward.1} parent=1 // pred_check
      _
    $region19: #{dqn_forward.1} parent=1 // pred_check_branch
      %34 = sbr.rel (0) target = $region21
    $region20: #{dqn_forward.1} parent=1 // pred_region
      _
    $region21: #{dqn_forward.1} parent=1 // pred_fallthru
      _
    // Predicated region
    $region22: #{dqn_forward.1} parent=1 // pred_check
      _
    $region23: #{dqn_forward.1} parent=1 // pred_check_branch
      %36 = sbr.rel (0) target = $region25
    $region24: #{dqn_forward.1} parent=1 // pred_region
      %38 = vsyncadd [#allocation5], 0
      %s39 = sshll.u32 %s5, 4
      %s40 = int_to_ptr.hbm [resolvable:$true] %s39
      %s41 = sshll.u32 [#allocation4], 4
      %s42 = int_to_ptr.vmem [resolvable:$true] %s41
      %47 = dma.hbm_to_vmem [thread:$0]  %s40, 1024, %s42, [#allocation5], 64, 64, 4
    $region25: #{dqn_forward.1} parent=1 // pred_fallthru
      _
    // Predicated region
    $region26: #{dqn_forward.1} parent=1 // pred_check
      _
    $region27: #{dqn_forward.1} parent=1 // pred_check_branch
      %49 = sbr.rel (0) target = $region29
    $region28: #{dqn_forward.1} parent=1 // pred_region
      _
    $region29: #{dqn_forward.1} parent=1 // pred_fallthru
      _
    // Predicated region
    $region30: #{dqn_forward.1} parent=1 // pred_check
      _
    $region31: #{dqn_forward.1} parent=1 // pred_check_branch
      %51 = sbr.rel (0) target = $region33
    $region32: #{dqn_forward.1} parent=1 // pred_region
      %53 = dma.done [#allocation3], 1024
    $region33: #{dqn_forward.1} parent=1 // pred_fallthru
      _
    // Predicated region
    $region34: #{dqn_forward.1} parent=1 // pred_check
      _
    $region35: #{dqn_forward.1} parent=1 // pred_check_branch
      %55 = sbr.rel (0) target = $region37
    $region36: #{dqn_forward.1} parent=1 // pred_region
      %57 = dma.done [#allocation5], 1024
    $region37: #{dqn_forward.1} parent=1 // pred_fallthru
      _
    %v59 = vld [vmem:[%s0] sm:$0xf]
    %v60 = vld [vmem:[%s1] sm:$0xf]
    %v61 = vld [vmem:[%s1 + $0x4] sm:$0xf]
    %v62 = vld [vmem:[%s2] sm:$0x1]
    %v64 = vperm.slane %v62, 0
    %v68 = vunpack.c.l.b16 %v60
    %v69 = vunpack.c.l.b16 %v61
    %v70 = vpack.c.b16 %v69, %v68
    %vm72 = vcmask 130048
    %v74 = vsel %vm72, %v59, 0
    %76 = vmatpush.bf16.msra.mxu0 0
    %77 = vmatpush.bf16.msra.mxu0 0
    %78 = vmatpush.bf16.msra.mxu0 0
    %79 = vmatpush.bf16.msra.mxu0 0
    %80 = vmatpush.bf16.msra.mxu0 0
    %81 = vmatpush.bf16.msra.mxu0 0
    %82 = vmatpush.bf16.msra.mxu0 0
    %83 = vmatpush.bf16.msra.mxu0 %v70
    %84 = vmatmul.bf16.gmra.mxu0 %v74
    %v85 = vpop.f32.mrf.mxu0
    %v86 = vadd.f32 %v64, %v85
    %v87 = vpop.f32.mrf.mxu0
    %88 = vdwg.mxu0
    %v89 = vmax.f32 %v86, 0.0
    %v90 = vpack.c.bf16 %v89, %v89
    %v91 = vld [vmem:[#allocation2] sm:$0xf]
    %v92 = vld [vmem:[#allocation2 + $0x4] sm:$0xf]
    %v93 = vld [vmem:[#allocation2 + $0x8] sm:$0xf]
    %v94 = vld [vmem:[#allocation2 + $0xc] sm:$0xf]
    %v95 = vld [vmem:[#allocation2 + $0x10] sm:$0xf]
    %v96 = vld [vmem:[#allocation2 + $0x14] sm:$0xf]
    %v97 = vld [vmem:[#allocation2 + $0x18] sm:$0xf]
    %v98 = vld [vmem:[#allocation2 + $0x1c] sm:$0xf]
    %v99 = vld [vmem:[#allocation2 + $0x20] sm:$0xf]
    %v100 = vld [vmem:[#allocation2 + $0x24] sm:$0xf]
    %v101 = vld [vmem:[#allocation2 + $0x28] sm:$0xf]
    %v102 = vld [vmem:[#allocation2 + $0x2c] sm:$0xf]
    %v103 = vld [vmem:[#allocation2 + $0x30] sm:$0xf]
    %v104 = vld [vmem:[#allocation2 + $0x34] sm:$0xf]
    %v105 = vld [vmem:[#allocation2 + $0x38] sm:$0xf]
    %v106 = vld [vmem:[#allocation2 + $0x3c] sm:$0xf]
    %v107 = vld [vmem:[%s4] sm:$0x1]
    %v109 = vperm.slane %v107, 0
    %v127 = vunpack.c.l.b16 %v91
    %v128 = vunpack.c.l.b16 %v92
    %v129 = vunpack.c.l.b16 %v93
    %v130 = vunpack.c.l.b16 %v94
    %v131 = vunpack.c.l.b16 %v95
    %v132 = vunpack.c.l.b16 %v96
    %v133 = vunpack.c.l.b16 %v97
    %v134 = vunpack.c.l.b16 %v98
    %v135 = vunpack.c.l.b16 %v99
    %v136 = vunpack.c.l.b16 %v100
    %v137 = vunpack.c.l.b16 %v101
    %v138 = vunpack.c.l.b16 %v102
    %v139 = vunpack.c.l.b16 %v103
    %v140 = vunpack.c.l.b16 %v104
    %v141 = vunpack.c.l.b16 %v105
    %v142 = vunpack.c.l.b16 %v106
    %v143 = vpack.c.b16 %v128, %v127
    %v144 = vpack.c.b16 %v130, %v129
    %v145 = vpack.c.b16 %v132, %v131
    %v146 = vpack.c.b16 %v134, %v133
    %v147 = vpack.c.b16 %v136, %v135
    %v148 = vpack.c.b16 %v138, %v137
    %v149 = vpack.c.b16 %v140, %v139
    %v150 = vpack.c.b16 %v142, %v141
    %159 = vmatpush.bf16.msra.mxu0 %v150
    %160 = vmatpush.bf16.msra.mxu0 %v149
    %161 = vmatpush.bf16.msra.mxu0 %v148
    %162 = vmatpush.bf16.msra.mxu0 %v147
    %163 = vmatpush.bf16.msra.mxu0 %v146
    %164 = vmatpush.bf16.msra.mxu0 %v145
    %165 = vmatpush.bf16.msra.mxu0 %v144
    %166 = vmatpush.bf16.msra.mxu0 %v143
    %167 = vmatmul.bf16.gmra.mxu0 %v90
    %v168 = vpop.f32.mrf.mxu0
    %v169 = vadd.f32 %v109, %v168
    %v170 = vpop.f32.mrf.mxu0
    %171 = vdwg.mxu0
    %v172 = vmax.f32 %v169, 0.0
    %v173 = vpack.c.bf16 %v172, %v172
    %v174 = vld [vmem:[#allocation4] sm:$0xf]
    %v175 = vld [vmem:[#allocation4 + $0x4] sm:$0xf]
    %v176 = vld [vmem:[#allocation4 + $0x8] sm:$0xf]
    %v177 = vld [vmem:[#allocation4 + $0xc] sm:$0xf]
    %v178 = vld [vmem:[#allocation4 + $0x10] sm:$0xf]
    %v179 = vld [vmem:[#allocation4 + $0x14] sm:$0xf]
    %v180 = vld [vmem:[#allocation4 + $0x18] sm:$0xf]
    %v181 = vld [vmem:[#allocation4 + $0x1c] sm:$0xf]
    %v182 = vld [vmem:[#allocation4 + $0x20] sm:$0xf]
    %v183 = vld [vmem:[#allocation4 + $0x24] sm:$0xf]
    %v184 = vld [vmem:[#allocation4 + $0x28] sm:$0xf]
    %v185 = vld [vmem:[#allocation4 + $0x2c] sm:$0xf]
    %v186 = vld [vmem:[#allocation4 + $0x30] sm:$0xf]
    %v187 = vld [vmem:[#allocation4 + $0x34] sm:$0xf]
    %v188 = vld [vmem:[#allocation4 + $0x38] sm:$0xf]
    %v189 = vld [vmem:[#allocation4 + $0x3c] sm:$0xf]
    %v190 = vld [vmem:[%s6] sm:$0x1]
    %v192 = vperm.slane %v190, 0
    %v210 = vunpack.c.l.b16 %v174
    %v211 = vunpack.c.l.b16 %v175
    %v212 = vunpack.c.l.b16 %v176
    %v213 = vunpack.c.l.b16 %v177
    %v214 = vunpack.c.l.b16 %v178
    %v215 = vunpack.c.l.b16 %v179
    %v216 = vunpack.c.l.b16 %v180
    %v217 = vunpack.c.l.b16 %v181
    %v218 = vunpack.c.l.b16 %v182
    %v219 = vunpack.c.l.b16 %v183
    %v220 = vunpack.c.l.b16 %v184
    %v221 = vunpack.c.l.b16 %v185
    %v222 = vunpack.c.l.b16 %v186
    %v223 = vunpack.c.l.b16 %v187
    %v224 = vunpack.c.l.b16 %v188
    %v225 = vunpack.c.l.b16 %v189
    %v226 = vpack.c.b16 %v211, %v210
    %v227 = vpack.c.b16 %v213, %v212
    %v228 = vpack.c.b16 %v215, %v214
    %v229 = vpack.c.b16 %v217, %v216
    %v230 = vpack.c.b16 %v219, %v218
    %v231 = vpack.c.b16 %v221, %v220
    %v232 = vpack.c.b16 %v223, %v222
    %v233 = vpack.c.b16 %v225, %v224
    %242 = vmatpush.bf16.msra.mxu0 %v233
    %243 = vmatpush.bf16.msra.mxu0 %v232
    %244 = vmatpush.bf16.msra.mxu0 %v231
    %245 = vmatpush.bf16.msra.mxu0 %v230
    %246 = vmatpush.bf16.msra.mxu0 %v229
    %247 = vmatpush.bf16.msra.mxu0 %v228
    %248 = vmatpush.bf16.msra.mxu0 %v227
    %249 = vmatpush.bf16.msra.mxu0 %v226
    %250 = vmatmul.bf16.gmra.mxu0 %v173
    %v251 = vpop.f32.mrf.mxu0
    %v252 = vadd.f32 %v192, %v251
    %v253 = vpop.f32.mrf.mxu0
    %254 = vdwg.mxu0
    %v255 = vpack.c.bf16 %v252, %v252
    %256 = vst [vmem:[%s7] sm:$0xf] %v255
    // Predicated region
    $region38: #{dqn_forward.1} parent=1 // pred_check
      _
    $region39: #{dqn_forward.1} parent=1 // pred_check_branch
      %258 = sbr.rel (0) target = $region41
    $region40: #{dqn_forward.1} parent=1 // pred_region
      _
    $region41: #{dqn_forward.1} parent=1 // pred_fallthru
      _
    // Predicated region
    $region42: #{dqn_forward.1} parent=1 // pred_check
      _
    $region43: #{dqn_forward.1} parent=1 // pred_check_branch
      %260 = sbr.rel (0) target = $region45
    $region44: #{dqn_forward.1} parent=1 // pred_region
      _
    $region45: #{dqn_forward.1} parent=1 // pred_fallthru
      _
    %261 = vsyncpa [#allocation3], 1
    %262 = vsyncpa [#allocation5], 1

</llo_original>
